<compile_context>
chip_gen: v5e
topology: v5e:2x2
jax: 0.10.0
libtpu: 0.0.40
codegen_flags: <defaults>
</compile_context>

<pallas_src>
import functools

import jax
import jax.numpy as jnp
import numpy as np
from jax.experimental import pallas as pl
from jax.experimental.pallas import tpu as pltpu

_LANES = 128


def _positive_softmax_tanh_kernel(x_ref, o_ref, *, d):
    """Process a (TB, W) tile; W == k*d, i.e. k original rows packed per tile row."""
    x = x_ref[...]                                    # (TB, W) float32
    tb, w = x.shape

    col = jax.lax.broadcasted_iota(jnp.int32, (tb, w), 1)
    is_last = (col % d) == (d - 1)                    # last element of each original row

    # sigmoid(x) = 0.5 * (tanh(x/2) + 1): one EUP tanh pass covers both
    # activations instead of a full-width tanh plus a full-width exp.
    xs = jnp.where(is_last, 0.5 * x, x)
    t = jnp.tanh(xs)
    v = jnp.where(is_last, 0.5 * t + 0.5, t)

    pos = jnp.logical_and(jnp.logical_not(is_last), v > 0.0)
    masked = jnp.where(pos, v, 0.0)

    if w == d:
        # One original row per tile row: plain lane reduction.
        seg_sum = jnp.sum(masked, axis=1, keepdims=True)          # (TB, 1)
    else:
        # k = w // d original rows packed per tile row: segmented reduction
        # with XLU lane rotations (exact f32 adds; d is a power of two).
        # Phase 1: after the tree, every lane with col % d == d-1 holds the
        # sum of its own d-lane segment.
        s = masked
        sh = 1
        while sh < d:
            s = s + pltpu.roll(s, shift=sh, axis=1)
            sh *= 2
        # Phase 2: keep only those per-segment sums and propagate each one
        # back across its own segment (roll by w - sh == roll by -sh).
        s = jnp.where(is_last, s, 0.0)
        sh = 1
        while sh < d:
            s = s + pltpu.roll(s, shift=w - sh, axis=1)
            sh *= 2
        seg_sum = s                                               # (TB, W)

    # Match the reference: rows with no positive entry are left unscaled.
    # (Note: if tiny positives underflow to a sum of exactly 0.0 the kernel
    # skips normalization while the reference divides by the tiny sum.)
    safe = jnp.where(seg_sum == 0.0, 1.0, seg_sum)
    inv = pl.reciprocal(safe)          # exact (approx=False) to hold 1e-5 accuracy
    o_ref[...] = jnp.where(pos, v * inv, v)


def positive_softmax_tanh(x, *, max_rows_per_tile=1024):
    """x: float [B, D] -> [B, D] with PositiveSoftmaxTanh forward semantics."""
    B, D = x.shape
    orig_dtype = x.dtype
    xf = x.astype(jnp.float32)

    # Lane-dense packing: put k original rows side-by-side so the kernel's
    # last dim is a full 128 lanes (unmasked stores, 100% VPU/EUP lane use).
    if D < _LANES and _LANES % D == 0:
        k = _LANES // D
    else:
        k = 1                      # D already wide / awkward: keep row layout
    W = k * D

    # Pad the batch so it reshapes cleanly into packed rows.
    row_pad = (-B) % k
    if row_pad:
        xf = jnp.pad(xf, ((0, row_pad), (0, 0)))
    Bp = (B + row_pad) // k
    xp = xf.reshape(Bp, W)

    # Tile the packed-row axis.  TB<=1024 -> 1024*128*4B = 512 KiB/buffer,
    # ~2 MiB total with in+out double-buffering: safely inside the default
    # scoped VMEM on every generation while big enough (>=512 rows) to sit
    # near the HBM roofline.
    TB = min(max_rows_per_tile, Bp)
    TB = ((max(TB, 8) + 7) // 8) * 8            # sublane-friendly tile rows
    tile_pad = (-Bp) % TB
    if tile_pad:
        xp = jnp.pad(xp, ((0, tile_pad), (0, 0)))
    Bpp = Bp + tile_pad
    grid = (Bpp // TB,)

    out = pl.pallas_call(
        functools.partial(_positive_softmax_tanh_kernel, d=D),
        out_shape=jax.ShapeDtypeStruct((Bpp, W), jnp.float32),
        grid_spec=pltpu.PrefetchScalarGridSpec(
            num_scalar_prefetch=0,
            grid=grid,
            in_specs=[pl.BlockSpec((TB, W), lambda i: (i, 0))],
            out_specs=pl.BlockSpec((TB, W), lambda i: (i, 0)),
        ),
        compiler_params=pltpu.CompilerParams(
            # Tiles are independent: lets v7x shard them across both
            # TensorCores; harmless on single-TC v5e/v6e.
            dimension_semantics=("parallel",),
        ),
    )(xp)

    out = out[:Bp].reshape(Bp * k, D)[:B]
    return out.astype(orig_dtype)


def _reference(x):
    # pure-numpy reference matching the PyTorch loop exactly
    out = np.array(x, dtype=np.float32, copy=True)
    for r in range(out.shape[0]):
        row = out[r]
        row[:-1] = np.tanh(row[:-1])
        row[-1] = 1.0 / (1.0 + np.exp(-row[-1]))
        mask = row[:-1] > 0
        if mask.any():
            row[:-1][mask] = row[:-1][mask] / np.sum(row[:-1][mask])
    return out


if __name__ == "__main__":
    # Small shape consistent with the module (rows of TD3 action values).
    B, D = 8, 16
    x = jax.random.normal(jax.random.PRNGKey(0), (B, D), dtype=jnp.float32)
    y = jax.block_until_ready(positive_softmax_tanh(x))
    ref = _reference(np.asarray(x))
    assert np.allclose(np.asarray(y), ref, rtol=1e-5, atol=1e-5), "mismatch (B=8, D=16)"

    # Exercise the multi-tile / parallel-grid path plus batch & tile padding.
    k2, k3 = jax.random.split(jax.random.PRNGKey(1))
    x2 = jax.random.normal(k2, (1003, 16), dtype=jnp.float32)
    y2 = jax.block_until_ready(positive_softmax_tanh(x2, max_rows_per_tile=64))
    ref2 = _reference(np.asarray(x2))
    assert np.allclose(np.asarray(y2), ref2, rtol=1e-5, atol=1e-5), "mismatch (B=1003, D=16)"

    # Exercise the unpacked (k == 1) fallback path.
    x3 = jax.random.normal(k3, (64, 24), dtype=jnp.float32)
    y3 = jax.block_until_ready(positive_softmax_tanh(x3))
    ref3 = _reference(np.asarray(x3))
    assert np.allclose(np.asarray(y3), ref3, rtol=1e-5, atol=1e-5), "mismatch (B=64, D=24)"

    print("KERNEL_OK")
</pallas_src>

<mosaic_0001>
module attributes {stable_mosaic.version = 11 : i64} {
  func.func @_positive_softmax_tanh_kernel(%arg0: i32, %arg1: memref<8x128xf32, #tpu.memory_space<vmem>>, %arg2: memref<8x128xf32, #tpu.memory_space<vmem>>) attributes {dimension_semantics = [#tpu.dimension_semantics<parallel>], iteration_bounds = array<i64: 1>, scalar_prefetch = 0 : i64, scratch_operands = 0 : i64, tpu.core_type = #tpu.core_type<tc>, window_params = [{transform_indices = @transform_0, window_bounds = array<i64: 8, 128>}, {transform_indices = @transform_1, window_bounds = array<i64: 8, 128>}]} {
    %c0 = arith.constant 0 : index
    %c0_0 = arith.constant 0 : index
    %0 = vector.load %arg1[%c0, %c0_0] : memref<8x128xf32, #tpu.memory_space<vmem>>, vector<8x128xf32>
    %1 = tpu.iota {dimensions = array<i32: 1>} : vector<8x128xi32>
    %c16_i32 = arith.constant 16 : i32
    %c0_i32 = arith.constant 0 : i32
    %2 = arith.cmpi eq, %c16_i32, %c0_i32 : i32
    %c1_i32 = arith.constant 1 : i32
    %3 = arith.select %2, %c1_i32, %c16_i32 : i32
    %4 = vector.broadcast %3 : i32 to vector<8x128xi32>
    %5 = arith.remsi %1, %4 : vector<8x128xi32>
    %c0_i32_1 = arith.constant 0 : i32
    %6 = vector.broadcast %c0_i32_1 : i32 to vector<8x128xi32>
    %7 = arith.cmpi ne, %5, %6 : vector<8x128xi32>
    %c0_i32_2 = arith.constant 0 : i32
    %8 = vector.broadcast %c0_i32_2 : i32 to vector<8x128xi32>
    %9 = arith.cmpi slt, %5, %8 : vector<8x128xi32>
    %c0_i32_3 = arith.constant 0 : i32
    %10 = arith.cmpi slt, %3, %c0_i32_3 : i32
    %11 = vector.broadcast %10 : i1 to vector<8x128xi1>
    %12 = vector.broadcast %11 : vector<8x128xi1> to vector<8x128xi1>
    %13 = arith.xori %9, %12 : vector<8x128xi1>
    %14 = arith.andi %13, %7 : vector<8x128xi1>
    %15 = vector.broadcast %3 : i32 to vector<8x128xi32>
    %16 = arith.addi %5, %15 : vector<8x128xi32>
    %17 = arith.select %14, %16, %5 : vector<8x128xi1>, vector<8x128xi32>
    %c15_i32 = arith.constant 15 : i32
    %18 = vector.broadcast %c15_i32 : i32 to vector<8x128xi32>
    %19 = arith.cmpi eq, %17, %18 : vector<8x128xi32>
    %cst = arith.constant 5.000000e-01 : f32
    %20 = vector.broadcast %cst : f32 to vector<8x128xf32>
    %21 = arith.mulf %20, %0 : vector<8x128xf32>
    %22 = arith.select %19, %21, %0 : vector<8x128xi1>, vector<8x128xf32>
    %23 = math.tanh %22 : vector<8x128xf32>
    %cst_4 = arith.constant 5.000000e-01 : f32
    %24 = vector.broadcast %cst_4 : f32 to vector<8x128xf32>
    %25 = arith.mulf %24, %23 : vector<8x128xf32>
    %cst_5 = arith.constant 5.000000e-01 : f32
    %26 = vector.broadcast %cst_5 : f32 to vector<8x128xf32>
    %27 = arith.addf %25, %26 : vector<8x128xf32>
    %28 = arith.select %19, %27, %23 : vector<8x128xi1>, vector<8x128xf32>
    %cst_6 = arith.constant dense<true> : vector<8x128xi1>
    %29 = arith.xori %19, %cst_6 : vector<8x128xi1>
    %cst_7 = arith.constant 0.000000e+00 : f32
    %30 = vector.broadcast %cst_7 : f32 to vector<8x128xf32>
    %31 = arith.cmpf ogt, %28, %30 : vector<8x128xf32>
    %32 = arith.andi %29, %31 : vector<8x128xi1>
    %cst_8 = arith.constant 0.000000e+00 : f32
    %33 = vector.broadcast %cst_8 : f32 to vector<8x128xf32>
    %34 = arith.select %32, %28, %33 : vector<8x128xi1>, vector<8x128xf32>
    %c1_i32_9 = arith.constant 1 : i32
    %35 = tpu.dynamic_rotate %34 by %c1_i32_9 dim 1 : vector<8x128xf32>, i32 -> vector<8x128xf32>
    %36 = arith.addf %34, %35 : vector<8x128xf32>
    %c2_i32 = arith.constant 2 : i32
    %37 = tpu.dynamic_rotate %36 by %c2_i32 dim 1 : vector<8x128xf32>, i32 -> vector<8x128xf32>
    %38 = arith.addf %36, %37 : vector<8x128xf32>
    %c4_i32 = arith.constant 4 : i32
    %39 = tpu.dynamic_rotate %38 by %c4_i32 dim 1 : vector<8x128xf32>, i32 -> vector<8x128xf32>
    %40 = arith.addf %38, %39 : vector<8x128xf32>
    %c8_i32 = arith.constant 8 : i32
    %41 = tpu.dynamic_rotate %40 by %c8_i32 dim 1 : vector<8x128xf32>, i32 -> vector<8x128xf32>
    %42 = arith.addf %40, %41 : vector<8x128xf32>
    %cst_10 = arith.constant 0.000000e+00 : f32
    %43 = vector.broadcast %cst_10 : f32 to vector<8x128xf32>
    %44 = arith.select %19, %42, %43 : vector<8x128xi1>, vector<8x128xf32>
    %c127_i32 = arith.constant 127 : i32
    %45 = tpu.dynamic_rotate %44 by %c127_i32 dim 1 : vector<8x128xf32>, i32 -> vector<8x128xf32>
    %46 = arith.addf %44, %45 : vector<8x128xf32>
    %c126_i32 = arith.constant 126 : i32
    %47 = tpu.dynamic_rotate %46 by %c126_i32 dim 1 : vector<8x128xf32>, i32 -> vector<8x128xf32>
    %48 = arith.addf %46, %47 : vector<8x128xf32>
    %c124_i32 = arith.constant 124 : i32
    %49 = tpu.dynamic_rotate %48 by %c124_i32 dim 1 : vector<8x128xf32>, i32 -> vector<8x128xf32>
    %50 = arith.addf %48, %49 : vector<8x128xf32>
    %c120_i32 = arith.constant 120 : i32
    %51 = tpu.dynamic_rotate %50 by %c120_i32 dim 1 : vector<8x128xf32>, i32 -> vector<8x128xf32>
    %52 = arith.addf %50, %51 : vector<8x128xf32>
    %cst_11 = arith.constant 0.000000e+00 : f32
    %53 = vector.broadcast %cst_11 : f32 to vector<8x128xf32>
    %54 = arith.cmpf oeq, %52, %53 : vector<8x128xf32>
    %cst_12 = arith.constant 1.000000e+00 : f32
    %55 = vector.broadcast %cst_12 : f32 to vector<8x128xf32>
    %56 = arith.select %54, %55, %52 : vector<8x128xi1>, vector<8x128xf32>
    %57 = tpu.reciprocal %56 : vector<8x128xf32> -> vector<8x128xf32>
    %58 = arith.mulf %28, %57 : vector<8x128xf32>
    %59 = arith.select %32, %58, %28 : vector<8x128xi1>, vector<8x128xf32>
    %c0_13 = arith.constant 0 : index
    %c0_14 = arith.constant 0 : index
    %60 = vector.load %arg2[%c0_13, %c0_14] : memref<8x128xf32, #tpu.memory_space<vmem>>, vector<8x128xf32>
    tpu.vector_store %arg2[%c0_13, %c0_14], %59 {strides = array<i32>} : memref<8x128xf32, #tpu.memory_space<vmem>>, vector<8x128xf32>,
    return
  }
  func.func @transform_0(%arg0: i32) -> (i32, i32) {
    %c0_i32 = arith.constant 0 : i32
    %c0_i32_0 = arith.constant 0 : i32
    return %arg0, %c0_i32 : i32, i32
  }
  func.func @transform_1(%arg0: i32) -> (i32, i32) {
    %c0_i32 = arith.constant 0 : i32
    %c0_i32_0 = arith.constant 0 : i32
    return %arg0, %c0_i32 : i32, i32
  }
}

</mosaic_0001>

<llo_original>
// kernel: tpu_custom_call.1
$region0: #{tpu_custom_call.1}
  #allocation0 [shape = 'u32[]', space=smem, size = 0x4, offset = 0x4, fixed_abs, tag = 'smem constant byte address 0x4 - core index']
  #allocation1 [shape = 'u32[72,128]{1,0:T(1,128)}', space=vmem, size = 0x9000, scoped, tag = 'internal scratch']
  %s0 = inlined_call_operand.hbm [shape: f32[8,128], index: 0, kind: input, shape index: {}]
  %s1 = inlined_call_operand.hbm [shape: f32[8,128], index: 1, kind: output, shape index: {}]
  %s2 = sld [smem:[#allocation0]]
  $region18: #{tpu_custom_call.1} parent=0
    _
  %s4 = ssub.s32 1, %s2
  %s5 = scalar_select 0, %s4, %s2
  $region1: #{tpu_custom_call.1} parent=0
    #allocation2 [shape = 'u8[4096]{0}', space=vmem, size = 0x1000, scoped, tag = 'input window, operand 0, single buffered']
    #allocation3 [shape = 's32[1]{0}', space=sflag, size = 0x4, scoped, tag = 'scoped memory for tpu_custom_call.1']
    #allocation4 [shape = 's32[1]{0}', space=sflag, size = 0x4, scoped, tag = 'scoped memory for tpu_custom_call.1']
    #allocation5 [shape = 'u8[4096]{0}', space=vmem, size = 0x1000, scoped, tag = 'output window, operand 0, single buffered']
    %6 = vsyncpa [#allocation3], 0
    %7 = vsyncpa [#allocation4], 0
    // Predicated region
    $region2: #{tpu_custom_call.1} parent=1 // pred_check
      _
    $region3: #{tpu_custom_call.1} parent=1 // pred_check_branch
      %9 = sbr.rel (0) target = $region5
    $region4: #{tpu_custom_call.1} parent=1 // pred_region
      %11 = vsyncadd [#allocation3], 0
      %s13 = sshll.u32 %s0, 4
      %s14 = int_to_ptr.hbm [resolvable:$true] %s13
      %s15 = sshll.u32 [#allocation2], 4
      %s16 = int_to_ptr.vmem [resolvable:$true] %s15
      %18 = dma.hbm_to_vmem [thread:$0]  %s14, 128, %s16, [#allocation3]
    $region5: #{tpu_custom_call.1} parent=1 // pred_fallthru
      _
    // Predicated region
    $region6: #{tpu_custom_call.1} parent=1 // pred_check
      _
    $region7: #{tpu_custom_call.1} parent=1 // pred_check_branch
      %20 = sbr.rel (0) target = $region9
    $region8: #{tpu_custom_call.1} parent=1 // pred_region
      %22 = dma.done [#allocation3], 128
    $region9: #{tpu_custom_call.1} parent=1 // pred_fallthru
      _
    %v23 = vld [vmem:[#allocation2] sm:$0xff]
    %v24 = vlaneseq
    %v25 = vand.u32 %v24, 127
    %vm26 = vcmp.lt.s32.totalorder %v25, 0
    %v27 = vsub.s32 0, %v25
    %v28 = vsel %vm26, %v27, %v25
    %v29 = vshrl.u32 %v28, 4
    %v30 = vand.u32 %v28, 15
    %v31 = vsub.s32 0, %v30
    %v32 = vsel %vm26, %v31, %v30
    %vm33 = vcmp.ne.s32.totalorder %v32, 0
    %vm34 = vcmp.lt.s32.totalorder %v32, 0
    %vm35 = vmand %vm34, %vm33
    %v36 = vadd.s32 %v32, 16
    %v37 = vsel %vm35, %v36, %v32
    %vm38 = vcmp.eq.s32.totalorder %v37, 15
    %v39 = vmul.f32 %v23, 0.5
    %v40 = vsel %vm38, %v39, %v23
    %v41 = vtanh.pop %v40
    %v42 = vmul.f32 %v41, 0.5
    %v43 = vadd.f32 %v42, 0.5
    %v44 = vsel %vm38, %v43, %v41
    %vm45 = vmxor %vm38, 1
    %vm46 = vcmp.gt.f32.partialorder %v44, 0.0
    %vm47 = vmand %vm45, %vm46
    %v48 = vsel %vm47, %v44, 0.0
    %49 = vrot.lane.b32.xlu0 %v48, 1
    %v50 = vpop.permute.xlu0 %49
    %v51 = vadd.f32 %v48, %v50
    %52 = vrot.lane.b32.xlu0 %v51, 2
    %v53 = vpop.permute.xlu0 %52
    %v54 = vadd.f32 %v51, %v53
    %55 = vrot.lane.b32.xlu0 %v54, 4
    %v56 = vpop.permute.xlu0 %55
    %v57 = vadd.f32 %v54, %v56
    %58 = vrot.lane.b32.xlu0 %v57, 8
    %v59 = vpop.permute.xlu0 %58
    %v60 = vadd.f32 %v57, %v59
    %v61 = vsel %vm38, %v60, 0.0
    %62 = vrot.lane.b32.xlu0 %v61, 127
    %v63 = vpop.permute.xlu0 %62
    %v64 = vadd.f32 %v61, %v63
    %65 = vrot.lane.b32.xlu0 %v64, 126
    %v66 = vpop.permute.xlu0 %65
    %v67 = vadd.f32 %v64, %v66
    %68 = vrot.lane.b32.xlu0 %v67, 124
    %v69 = vpop.permute.xlu0 %68
    %v70 = vadd.f32 %v67, %v69
    %71 = vrot.lane.b32.xlu0 %v70, 120
    %v72 = vpop.permute.xlu0 %71
    %v73 = vadd.f32 %v70, %v72
    %vm74 = vcmp.eq.f32.partialorder %v73, 0.0
    %v75 = vsel %vm74, 1.0, %v73
    %v76 = vrcp.pop %v75
    %v77 = vmul.f32 %v75, %v76
    %v78 = vsub.f32 1.0, %v77
    %v79 = vmul.f32 %v76, %v78
    %v80 = vadd.f32 %v76, %v79
    %vm81 = vweird.f32 %v75
    %vm82 = vweird.f32 %v76
    %vm83 = vmor %vm81, %vm82
    %v84 = vsel %vm83, %v76, %v80
    %v85 = vand.u32 2147483647, %v75
    %vm86 = vcmp.eq.f32.partialorder %v85, 8.507059e+37
    %v87 = vand.u32 %v75, 2147483648
    %v88 = vor.u32 1.1754944e-38, %v87
    %v89 = vsel %vm86, %v88, %v84
    %v90 = vmul.f32 %v44, %v89
    %v91 = vsel %vm47, %v90, %v44
    %92 = vst [vmem:[#allocation5] sm:$0xff] %v91
    // Predicated region
    $region10: #{tpu_custom_call.1} parent=1 // pred_check
      _
    $region11: #{tpu_custom_call.1} parent=1 // pred_check_branch
      %94 = sbr.rel (0) target = $region13
    $region12: #{tpu_custom_call.1} parent=1 // pred_region
      %96 = vsyncadd [#allocation4], 0
      %s98 = sshll.u32 [#allocation5], 4
      %s99 = int_to_ptr.vmem [resolvable:$true] %s98
      %s100 = sshll.u32 %s1, 4
      %s101 = int_to_ptr.hbm [resolvable:$true] %s100
      %103 = dma.vmem_to_hbm [thread:$0]  %s99, 128, %s101, [#allocation4]
    $region13: #{tpu_custom_call.1} parent=1 // pred_fallthru
      _
    // Predicated region
    $region14: #{tpu_custom_call.1} parent=1 // pred_check
      _
    $region15: #{tpu_custom_call.1} parent=1 // pred_check_branch
      %105 = sbr.rel (0) target = $region17
    $region16: #{tpu_custom_call.1} parent=1 // pred_region
      %107 = dma.done [#allocation4], 128
    $region17: #{tpu_custom_call.1} parent=1 // pred_fallthru
      _
    %108 = vsyncpa [#allocation3], 1
    %109 = vsyncpa [#allocation4], 1

</llo_original>
